<compile_context>
chip_gen: v5e
topology: v5e:2x2
jax: 0.10.0
libtpu: 0.0.40
codegen_flags: <defaults>
</compile_context>

<pallas_src>
import math
import functools

import jax
import jax.numpy as jnp
from jax.experimental import pallas as pl
from jax.experimental.pallas import tpu as pltpu


# ----------------------------------- helpers ----------------------------------------

def _vmem_limit_bytes():
    """~75% of physical VMEM, capped at 96 MiB (v5e/v6e: 96 MiB, v7x: 48 MiB)."""
    cap = 64 * 1024 * 1024          # conservative fallback if query fails
    try:
        cap = pltpu.get_tpu_info().vmem_capacity_bytes
    except Exception:
        pass
    return int(min(96 * 1024 * 1024, cap * 3 // 4))


def _const_block_spec(shape):
    """BlockSpec for a block whose index never changes across the grid.

    Single-buffered so resident weights don't pay the default 2x VMEM."""
    zeros = (0,) * len(shape)
    kwargs = {}
    if hasattr(pl, "Buffered"):
        kwargs["pipeline_mode"] = pl.Buffered(1)
    return pl.BlockSpec(shape, lambda *_: zeros, **kwargs)


def _seq_tile(s, target):
    """Largest multiple of 8 <= target that divides s (falls back to full s)."""
    # TODO(synk): for very long, non-multiple-of-8 S this falls back to one big tile;
    # pad S at the wrapper level if that ever matters.
    if s <= target or s % 8 != 0:
        return s
    t = (target // 8) * 8
    while s % t != 0:
        t -= 8
    return t


# --------------------------- call 1: fused QKV projection ---------------------------

def _qkv_proj_kernel(x_ref, wqkv_ref, bqkv_ref, q_ref, k_ref, v_ref,
                     *, num_heads, d_model, compute_dtype):
    x = x_ref[0]                                               # (ts, d_x) f32
    ts = x.shape[0]
    d_k = d_model // num_heads

    # one fused MXU matmul for Q, K, V (f32 accumulate); scale already in w_q/b_q
    qkv = (jnp.dot(x.astype(compute_dtype), wqkv_ref[...],
                   preferred_element_type=jnp.float32) + bqkv_ref[...])

    def heads(t):                                              # (ts, d_model) -> (H, ts, d_k)
        return t.reshape(ts, num_heads, d_k).transpose(1, 0, 2)

    # head split/transpose happens ONCE here, so the flash inner loop below never
    # spends XLU slots on layout.
    q_ref[0] = heads(qkv[:, 0 * d_model:1 * d_model]).astype(q_ref.dtype)
    k_ref[0] = heads(qkv[:, 1 * d_model:2 * d_model]).astype(k_ref.dtype)
    v_ref[0] = heads(qkv[:, 2 * d_model:3 * d_model]).astype(v_ref.dtype)


def qkv_projection(x, p, num_heads, compute_dtype):
    B, S, d_x = x.shape
    d_model = p["wqkv"].shape[1] // 3
    d_k = d_model // num_heads
    ts = _seq_tile(S, 512)

    kern = functools.partial(_qkv_proj_kernel, num_heads=num_heads,
                             d_model=d_model, compute_dtype=compute_dtype)
    head_shape = jax.ShapeDtypeStruct((B, num_heads, S, d_k), compute_dtype)
    head_spec = pl.BlockSpec((1, num_heads, ts, d_k), lambda b, s: (b, 0, s, 0))

    return pl.pallas_call(
        kern,
        grid=(B, S // ts),
        in_specs=[
            pl.BlockSpec((1, ts, d_x), lambda b, s: (b, s, 0)),
            _const_block_spec((d_x, 3 * d_model)),
            _const_block_spec((1, 3 * d_model)),
        ],
        out_specs=(head_spec, head_spec, head_spec),
        out_shape=(head_shape, head_shape, head_shape),
        compiler_params=pltpu.CompilerParams(
            dimension_semantics=("parallel", "parallel"),
            vmem_limit_bytes=_vmem_limit_bytes()),
    )(x, p["wqkv"], p["bqkv"])


# ------------- call 2: flash attention + output projection + add & norm -------------

def _flash_attn_addnorm_kernel(q_ref, k_ref, v_ref, x_ref, wo_ref, bo_ref,
                               g_ref, beta_ref, o_ref, m_sc, l_sc, acc_sc,
                               *, compute_dtype):
    ki = pl.program_id(2)

    @pl.when(ki == 0)
    def _():
        m_sc[...] = jnp.full(m_sc.shape, -jnp.inf, jnp.float32)
        l_sc[...] = jnp.zeros(l_sc.shape, jnp.float32)
        acc_sc[...] = jnp.zeros(acc_sc.shape, jnp.float32)

    q = q_ref[0]                                               # (H, tq, d_k) compute_dtype
    k = k_ref[0]                                               # (H, tk, d_k)
    v = v_ref[0]                                               # (H, tk, d_k)

    # scores: heads as batch dim, contract d_k (scale folded into w_q), f32 accumulate
    # TODO(synk): d_k below 128/256 underfills the MXU; pack heads into M for very
    # small d_k if this ever becomes MXU-bound.
    s = jnp.einsum('hqd,hkd->hqk', q, k, preferred_element_type=jnp.float32)
    # TODO(synk): optional attention mask not wired in (reference forward uses mask=None).

    m_prev = m_sc[...]
    m_new = jnp.maximum(m_prev, jnp.max(s, axis=-1, keepdims=True))   # (H, tq, 1)
    alpha = jnp.exp(m_prev - m_new)
    p = jnp.exp(s - m_new)
    l_sc[...] = alpha * l_sc[...] + jnp.sum(p, axis=-1, keepdims=True)
    acc_sc[...] = alpha * acc_sc[...] + jnp.einsum(
        'hqk,hkd->hqd', p.astype(compute_dtype), v,
        preferred_element_type=jnp.float32)
    m_sc[...] = m_new
    # TODO(synk): attention dropout omitted (eval-mode identity).

    @pl.when(ki == pl.num_programs(2) - 1)
    def _():
        num_heads, tq, d_k = acc_sc.shape
        z = acc_sc[...] * pl.reciprocal(l_sc[...], approx=True)       # (H, tq, d_k)
        z = z.transpose(1, 0, 2).reshape(tq, num_heads * d_k)         # lane-dense (tq, d_model)
        attn = (jnp.dot(z.astype(compute_dtype), wo_ref[...],
                        preferred_element_type=jnp.float32) + bo_ref[...])
        r = x_ref[0] + attn                                           # residual in f32
        mu = jnp.mean(r, axis=-1, keepdims=True)
        var = jnp.mean(jnp.square(r - mu), axis=-1, keepdims=True)
        rn = (r - mu) * jax.lax.rsqrt(var + 1e-5)
        o_ref[0] = (rn * g_ref[...] + beta_ref[...]).astype(o_ref.dtype)


def flash_attention_addnorm(x, q, k, v, p, compute_dtype, tq_target=256, tk_target=256):
    B, S, d_x = x.shape
    _, num_heads, _, d_k = q.shape
    d_model = num_heads * d_k
    tq = _seq_tile(S, tq_target)
    tk = _seq_tile(S, tk_target)

    kern = functools.partial(_flash_attn_addnorm_kernel, compute_dtype=compute_dtype)
    return pl.pallas_call(
        kern,
        grid=(B, S // tq, S // tk),
        in_specs=[
            pl.BlockSpec((1, num_heads, tq, d_k), lambda b, qi, ki: (b, 0, qi, 0)),
            pl.BlockSpec((1, num_heads, tk, d_k), lambda b, qi, ki: (b, 0, ki, 0)),
            pl.BlockSpec((1, num_heads, tk, d_k), lambda b, qi, ki: (b, 0, ki, 0)),
            pl.BlockSpec((1, tq, d_x), lambda b, qi, ki: (b, qi, 0)),
            _const_block_spec((d_model, d_x)),
            _const_block_spec((1, d_x)),
            _const_block_spec((1, d_x)),
            _const_block_spec((1, d_x)),
        ],
        out_specs=pl.BlockSpec((1, tq, d_x), lambda b, qi, ki: (b, qi, 0)),
        out_shape=jax.ShapeDtypeStruct((B, S, d_x), x.dtype),
        scratch_shapes=[
            pltpu.VMEM((num_heads, tq, 1), jnp.float32),   # running max m
            pltpu.VMEM((num_heads, tq, 1), jnp.float32),   # running denom l
            pltpu.VMEM((num_heads, tq, d_k), jnp.float32), # running numerator acc
        ],
        compiler_params=pltpu.CompilerParams(
            dimension_semantics=("parallel", "parallel", "arbitrary"),
            vmem_limit_bytes=_vmem_limit_bytes()),
    )(q, k, v, x, p["wo"], p["bo"], p["ln1_g"], p["ln1_b"])


# ----------------------------- call 3: FFN + add & norm -----------------------------

def _ffn_addnorm_kernel(x_ref, w1_ref, b1_ref, w2_ref, b2_ref, g_ref, beta_ref, o_ref,
                        *, compute_dtype):
    x = x_ref[...]                                             # (tm, d_x) f32
    h = (jnp.dot(x.astype(compute_dtype), w1_ref[...],
                 preferred_element_type=jnp.float32) + b1_ref[...])
    # exact GELU (erf form, matches torch.nn.GELU() default), f32
    h = 0.5 * h * (1.0 + jax.lax.erf(h * (1.0 / math.sqrt(2.0))))
    # TODO(synk): FFN dropout omitted (eval-mode identity).
    y = (jnp.dot(h.astype(compute_dtype), w2_ref[...],
                 preferred_element_type=jnp.float32) + b2_ref[...])

    r = x + y
    mu = jnp.mean(r, axis=-1, keepdims=True)
    var = jnp.mean(jnp.square(r - mu), axis=-1, keepdims=True)
    rn = (r - mu) * jax.lax.rsqrt(var + 1e-5)
    o_ref[...] = (rn * g_ref[...] + beta_ref[...]).astype(o_ref.dtype)


def fused_ffn_addnorm(x, p, compute_dtype):
    B, S, d_x = x.shape
    H = p["ffn_w1"].shape[1]
    M = B * S

    vmem_cap = _vmem_limit_bytes()
    tm_target = 1024 if vmem_cap >= 80 * 1024 * 1024 else 512   # bigger tiles on 128 MiB chips
    tm = min(tm_target, ((M + 7) // 8) * 8)                     # multiple of 8, <= target
    m_pad = pl.cdiv(M, tm) * tm                                 # pad ragged M instead of
    x2d = x.reshape(M, d_x)                                     # one huge / tiny tile
    if m_pad != M:
        x2d = jnp.pad(x2d, ((0, m_pad - M), (0, 0)))

    # TODO(synk): for very large d_x/ffn the weight matrices should additionally be
    # tiled along K/N with a VMEM accumulator; at these sizes they stay resident.
    kern = functools.partial(_ffn_addnorm_kernel, compute_dtype=compute_dtype)
    out = pl.pallas_call(
        kern,
        grid=(m_pad // tm,),
        in_specs=[
            pl.BlockSpec((tm, d_x), lambda i: (i, 0)),
            _const_block_spec((d_x, H)),
            _const_block_spec((1, H)),
            _const_block_spec((H, d_x)),
            _const_block_spec((1, d_x)),
            _const_block_spec((1, d_x)),
            _const_block_spec((1, d_x)),
        ],
        out_specs=pl.BlockSpec((tm, d_x), lambda i: (i, 0)),
        out_shape=jax.ShapeDtypeStruct((m_pad, d_x), x.dtype),
        compiler_params=pltpu.CompilerParams(
            dimension_semantics=("parallel",),
            vmem_limit_bytes=vmem_cap),
    )(x2d, p["ffn_w1"], p["ffn_b1"], p["ffn_w2"], p["ffn_b2"],
      p["ln2_g"], p["ln2_b"])
    return out[:M].reshape(B, S, d_x)


# --------------------------------- encoder block ------------------------------------

def encoder_block(x, prepared, num_heads, compute_dtype=jnp.bfloat16):
    # Pass compute_dtype=jnp.float32 (and prepare params the same way) for exact
    # f32 matmuls (slower on the MXU).
    q, k, v = qkv_projection(x, prepared, num_heads, compute_dtype)
    x = flash_attention_addnorm(x, q, k, v, prepared, compute_dtype)
    return fused_ffn_addnorm(x, prepared, compute_dtype)


# -------------------------------- parameter handling --------------------------------

def _init_linear(key, din, dout, scale=0.02):
    kw, kb = jax.random.split(key)
    w = jax.random.normal(kw, (din, dout), jnp.float32) * scale
    b = jax.random.normal(kb, (dout,), jnp.float32) * scale
    return w, b


def init_params(key, d_x, d_model, ffn_hidden):
    keys = jax.random.split(key, 6)
    wq, bq = _init_linear(keys[0], d_x, d_model)
    wk, bk = _init_linear(keys[1], d_x, d_model)
    wv, bv = _init_linear(keys[2], d_x, d_model)
    wo, bo = _init_linear(keys[3], d_model, d_x)
    w1, b1 = _init_linear(keys[4], d_x, ffn_hidden)
    w2, b2 = _init_linear(keys[5], ffn_hidden, d_x)
    return dict(
        w_q=wq, b_q=bq, w_k=wk, b_k=bk, w_v=wv, b_v=bv, w_o=wo, b_o=bo,
        ffn_w1=w1, ffn_b1=b1, ffn_w2=w2, ffn_b2=b2,
        ln1_g=jnp.ones((d_x,), jnp.float32), ln1_b=jnp.zeros((d_x,), jnp.float32),
        ln2_g=jnp.ones((d_x,), jnp.float32), ln2_b=jnp.zeros((d_x,), jnp.float32),
    )


def prepare_params(raw, num_heads, compute_dtype=jnp.bfloat16):
    """One-time prep: concat QKV weights, fold 1/sqrt(d_k) into w_q/b_q, cast to
    compute_dtype, reshape biases — so no per-forward concat/cast HBM traffic."""
    d_x, d_model = raw["w_q"].shape
    assert d_model % num_heads == 0
    d_k = d_model // num_heads
    scale = 1.0 / math.sqrt(d_k)
    f32 = jnp.float32
    return dict(
        wqkv=jnp.concatenate([raw["w_q"] * scale, raw["w_k"], raw["w_v"]],
                             axis=1).astype(compute_dtype),
        bqkv=jnp.concatenate([raw["b_q"] * scale, raw["b_k"], raw["b_v"]]
                             ).reshape(1, 3 * d_model).astype(f32),
        wo=raw["w_o"].astype(compute_dtype),
        bo=raw["b_o"].reshape(1, -1).astype(f32),
        ln1_g=raw["ln1_g"].reshape(1, -1).astype(f32),
        ln1_b=raw["ln1_b"].reshape(1, -1).astype(f32),
        ffn_w1=raw["ffn_w1"].astype(compute_dtype),
        ffn_b1=raw["ffn_b1"].reshape(1, -1).astype(f32),
        ffn_w2=raw["ffn_w2"].astype(compute_dtype),
        ffn_b2=raw["ffn_b2"].reshape(1, -1).astype(f32),
        ln2_g=raw["ln2_g"].reshape(1, -1).astype(f32),
        ln2_b=raw["ln2_b"].reshape(1, -1).astype(f32),
    )


if __name__ == "__main__":
    B, S = 2, 8
    d_x, d_model, num_heads, ffn_hidden = 32, 32, 8, 64
    compute_dtype = jnp.bfloat16

    key = jax.random.PRNGKey(0)
    kx, kp = jax.random.split(key)
    x = jax.random.normal(kx, (B, S, d_x), jnp.float32)
    raw_params = init_params(kp, d_x, d_model, ffn_hidden)
    params = prepare_params(raw_params, num_heads, compute_dtype)

    out = encoder_block(x, params, num_heads, compute_dtype)
    out = jax.block_until_ready(out)
    assert out.shape == (B, S, d_x), out.shape
    assert jnp.all(jnp.isfinite(out))
    print("KERNEL_OK")
</pallas_src>

<mosaic_0001>
module attributes {stable_mosaic.version = 11 : i64} {
  func.func @_qkv_proj_kernel(%arg0: i32, %arg1: i32, %arg2: memref<1x8x32xf32, #tpu.memory_space<vmem>>, %arg3: memref<32x96xbf16, #tpu.memory_space<vmem>>, %arg4: memref<1x96xf32, #tpu.memory_space<vmem>>, %arg5: memref<1x8x8x4xbf16, #tpu.memory_space<vmem>>, %arg6: memref<1x8x8x4xbf16, #tpu.memory_space<vmem>>, %arg7: memref<1x8x8x4xbf16, #tpu.memory_space<vmem>>) attributes {dimension_semantics = [#tpu.dimension_semantics<parallel>, #tpu.dimension_semantics<parallel>], iteration_bounds = array<i64: 2, 1>, scalar_prefetch = 0 : i64, scratch_operands = 0 : i64, tpu.core_type = #tpu.core_type<tc>, window_params = [{transform_indices = @transform_0, window_bounds = array<i64: 1, 8, 32>}, {pipeline_mode = #tpu.pipeline_mode<synchronous>, transform_indices = @transform_1, window_bounds = array<i64: 32, 96>}, {pipeline_mode = #tpu.pipeline_mode<synchronous>, transform_indices = @transform_2, window_bounds = array<i64: 1, 96>}, {transform_indices = @transform_3, window_bounds = array<i64: 1, 8, 8, 4>}, {transform_indices = @transform_4, window_bounds = array<i64: 1, 8, 8, 4>}, {transform_indices = @transform_5, window_bounds = array<i64: 1, 8, 8, 4>}]} {
    %c0 = arith.constant 0 : index
    %c0_0 = arith.constant 0 : index
    %c0_1 = arith.constant 0 : index
    %0 = vector.load %arg2[%c0, %c0_0, %c0_1] : memref<1x8x32xf32, #tpu.memory_space<vmem>>, vector<1x8x32xf32>
    %1 = vector.shape_cast %0 : vector<1x8x32xf32> to vector<8x32xf32>
    %2 = arith.truncf %1 : vector<8x32xf32> to vector<8x32xbf16>
    %c0_2 = arith.constant 0 : index
    %c0_3 = arith.constant 0 : index
    %3 = vector.load %arg3[%c0_2, %c0_3] : memref<32x96xbf16, #tpu.memory_space<vmem>>, vector<32x96xbf16>
    %cst = arith.constant dense<0.000000e+00> : vector<8x96xf32>
    %4 = tpu.matmul %2, %3, %cst {dimension_numbers = #tpu.dot_dimension_numbers<[1], [0], [0], [1], [0, 0, 1, 1], [], []>} : vector<8x32xbf16>, vector<32x96xbf16>, vector<8x96xf32> -> vector<8x96xf32>
    %c0_4 = arith.constant 0 : index
    %c0_5 = arith.constant 0 : index
    %5 = vector.load %arg4[%c0_4, %c0_5] : memref<1x96xf32, #tpu.memory_space<vmem>>, vector<1x96xf32>
    %6 = vector.broadcast %5 : vector<1x96xf32> to vector<8x96xf32>
    %7 = arith.addf %4, %6 : vector<8x96xf32>
    %8 = vector.extract_strided_slice %7 {offsets = [0, 0], sizes = [8, 32], strides = [1, 1]} : vector<8x96xf32> to vector<8x32xf32>
    %9 = vector.shape_cast %8 : vector<8x32xf32> to vector<8x8x4xf32>
    %10 = tpu.transpose %9, [1, 0, 2] : vector<8x8x4xf32> -> vector<8x8x4xf32>
    %11 = arith.truncf %10 : vector<8x8x4xf32> to vector<8x8x4xbf16>
    %c0_6 = arith.constant 0 : index
    %c0_7 = arith.constant 0 : index
    %c0_8 = arith.constant 0 : index
    %c0_9 = arith.constant 0 : index
    %12 = vector.load %arg5[%c0_6, %c0_7, %c0_8, %c0_9] : memref<1x8x8x4xbf16, #tpu.memory_space<vmem>>, vector<1x8x8x4xbf16>
    %13 = vector.shape_cast %12 : vector<1x8x8x4xbf16> to vector<8x8x4xbf16>
    %14 = vector.shape_cast %11 : vector<8x8x4xbf16> to vector<1x8x8x4xbf16>
    tpu.vector_store %arg5[%c0_6, %c0_7, %c0_8, %c0_9], %14 {strides = array<i32>} : memref<1x8x8x4xbf16, #tpu.memory_space<vmem>>, vector<1x8x8x4xbf16>,
    %15 = vector.extract_strided_slice %7 {offsets = [0, 32], sizes = [8, 32], strides = [1, 1]} : vector<8x96xf32> to vector<8x32xf32>
    %16 = vector.shape_cast %15 : vector<8x32xf32> to vector<8x8x4xf32>
    %17 = tpu.transpose %16, [1, 0, 2] : vector<8x8x4xf32> -> vector<8x8x4xf32>
    %18 = arith.truncf %17 : vector<8x8x4xf32> to vector<8x8x4xbf16>
    %c0_10 = arith.constant 0 : index
    %c0_11 = arith.constant 0 : index
    %c0_12 = arith.constant 0 : index
    %c0_13 = arith.constant 0 : index
    %19 = vector.load %arg6[%c0_10, %c0_11, %c0_12, %c0_13] : memref<1x8x8x4xbf16, #tpu.memory_space<vmem>>, vector<1x8x8x4xbf16>
    %20 = vector.shape_cast %19 : vector<1x8x8x4xbf16> to vector<8x8x4xbf16>
    %21 = vector.shape_cast %18 : vector<8x8x4xbf16> to vector<1x8x8x4xbf16>
    tpu.vector_store %arg6[%c0_10, %c0_11, %c0_12, %c0_13], %21 {strides = array<i32>} : memref<1x8x8x4xbf16, #tpu.memory_space<vmem>>, vector<1x8x8x4xbf16>,
    %22 = vector.extract_strided_slice %7 {offsets = [0, 64], sizes = [8, 32], strides = [1, 1]} : vector<8x96xf32> to vector<8x32xf32>
    %23 = vector.shape_cast %22 : vector<8x32xf32> to vector<8x8x4xf32>
    %24 = tpu.transpose %23, [1, 0, 2] : vector<8x8x4xf32> -> vector<8x8x4xf32>
    %25 = arith.truncf %24 : vector<8x8x4xf32> to vector<8x8x4xbf16>
    %c0_14 = arith.constant 0 : index
    %c0_15 = arith.constant 0 : index
    %c0_16 = arith.constant 0 : index
    %c0_17 = arith.constant 0 : index
    %26 = vector.load %arg7[%c0_14, %c0_15, %c0_16, %c0_17] : memref<1x8x8x4xbf16, #tpu.memory_space<vmem>>, vector<1x8x8x4xbf16>
    %27 = vector.shape_cast %26 : vector<1x8x8x4xbf16> to vector<8x8x4xbf16>
    %28 = vector.shape_cast %25 : vector<8x8x4xbf16> to vector<1x8x8x4xbf16>
    tpu.vector_store %arg7[%c0_14, %c0_15, %c0_16, %c0_17], %28 {strides = array<i32>} : memref<1x8x8x4xbf16, #tpu.memory_space<vmem>>, vector<1x8x8x4xbf16>,
    return
  }
  func.func @transform_0(%arg0: i32, %arg1: i32) -> (i32, i32, i32) {
    %c0_i32 = arith.constant 0 : i32
    %c0_i32_0 = arith.constant 0 : i32
    return %arg0, %arg1, %c0_i32 : i32, i32, i32
  }
  func.func @transform_1(%arg0: i32, %arg1: i32) -> (i32, i32) {
    %c0_i32 = arith.constant 0 : i32
    %c0_i32_0 = arith.constant 0 : i32
    %c0_i32_1 = arith.constant 0 : i32
    return %c0_i32, %c0_i32_0 : i32, i32
  }
  func.func @transform_2(%arg0: i32, %arg1: i32) -> (i32, i32) {
    %c0_i32 = arith.constant 0 : i32
    %c0_i32_0 = arith.constant 0 : i32
    %c0_i32_1 = arith.constant 0 : i32
    return %c0_i32, %c0_i32_0 : i32, i32
  }
  func.func @transform_3(%arg0: i32, %arg1: i32) -> (i32, i32, i32, i32) {
    %c0_i32 = arith.constant 0 : i32
    %c0_i32_0 = arith.constant 0 : i32
    %c0_i32_1 = arith.constant 0 : i32
    return %arg0, %c0_i32, %arg1, %c0_i32_0 : i32, i32, i32, i32
  }
  func.func @transform_4(%arg0: i32, %arg1: i32) -> (i32, i32, i32, i32) {
    %c0_i32 = arith.constant 0 : i32
    %c0_i32_0 = arith.constant 0 : i32
    %c0_i32_1 = arith.constant 0 : i32
    return %arg0, %c0_i32, %arg1, %c0_i32_0 : i32, i32, i32, i32
  }
  func.func @transform_5(%arg0: i32, %arg1: i32) -> (i32, i32, i32, i32) {
    %c0_i32 = arith.constant 0 : i32
    %c0_i32_0 = arith.constant 0 : i32
    %c0_i32_1 = arith.constant 0 : i32
    return %arg0, %c0_i32, %arg1, %c0_i32_0 : i32, i32, i32, i32
  }
}

</mosaic_0001>

<llo_original>
// kernel: tpu_custom_call.1
$region0: #{tpu_custom_call.1}
  #allocation0 [shape = 'u32[]', space=smem, size = 0x4, offset = 0x4, fixed_abs, tag = 'smem constant byte address 0x4 - core index']
  #allocation1 [shape = 'u32[72,128]{1,0:T(1,128)}', space=vmem, size = 0x9000, scoped, tag = 'internal scratch']
  %s0 = inlined_call_operand.hbm [shape: f32[2,8,32], index: 0, kind: input, shape index: {}]
  %s1 = inlined_call_operand.hbm [shape: bf16[32,96], index: 1, kind: input, shape index: {}]
  %s2 = inlined_call_operand.vmem [shape: f32[1,96], index: 2, kind: input, shape index: {}]
  %s3 = inlined_call_operand.vmem [shape: bf16[2,8,8,4], index: 3, kind: output, shape index: {0}]
  %s4 = inlined_call_operand.vmem [shape: bf16[2,8,8,4], index: 4, kind: output, shape index: {1}]
  %s5 = inlined_call_operand.vmem [shape: bf16[2,8,8,4], index: 5, kind: output, shape index: {2}]
  %6 = xla_tuple %s3, %s4, %s5
  %s7 = sld [smem:[#allocation0]]
  $region69: #{tpu_custom_call.1} parent=0
    _
  %s9 = ssub.s32 1, %s7
  %s10 = scalar_select 0, %s9, %s7
  $region1: #{tpu_custom_call.1} parent=0
    #allocation2 [shape = 'u8[8192]{0}', space=vmem, size = 0x2000, scoped, tag = 'input window, operand 0']
    #allocation3 [shape = 's32[2]{0}', space=sflag, size = 0x8, scoped, tag = 'scoped memory for tpu_custom_call.1']
    #allocation4 [shape = 'u8[8192]{0}', space=vmem, size = 0x2000, scoped, tag = 'input window, operand 1, single buffered']
    #allocation5 [shape = 's32[1]{0}', space=sflag, size = 0x4, scoped, tag = 'scoped memory for tpu_custom_call.1']
    %11 = vsyncpa [#allocation3], 0
    %s12 = scalar_lea.sflag [#allocation3], 1
    %13 = vsyncpa %s12, 0
    %14 = vsyncpa [#allocation5], 0
    loop: start=0, step=1, limit=4
    $region2: #{tpu_custom_call.1} parent=1 // loop_pre_header
      _
    $region3: #{tpu_custom_call.1} parent=1 // loop_header
      %s16 = sphi 0, %s20
      %p17 = scmp.ge.s32.totalorder %s16, 4
      %s23 = sphi 0, %s35
      %s24 = sphi 0, %s31
      %s25 = sphi 0, %s23
      %s26 = sphi 0, %s24
      %s27 = sphi 0, %s25
      %s28 = sphi 0, %s26
      %s40 = sphi 0, %s42
      %s43 = sphi 0, %s40
      %s44 = sphi 0, %s43
      %s60 = sphi 0, %s44
      %s64 = sphi 0, %s64
      %s66 = sphi 0, %s64
      %s67 = sphi 0, %s66
      %s81 = sphi 0, %s67
      %s85 = sphi 0, %s85
      %s87 = sphi 0, %s85
      %s88 = sphi 0, %s87
      %s102 = sphi 0, %s88
      %s110 = sphi 0, %s112
      %s113 = sphi 0, %s110
      %s114 = sphi 0, %s113
      %s130 = sphi 0, %s114
      %s138 = sphi 0, %s140
      %s141 = sphi 0, %s138
      %s142 = sphi 0, %s141
      %s158 = sphi 0, %s142
      %s166 = sphi 0, %s168
      %s169 = sphi 0, %s166
      %s170 = sphi 0, %s169
      %s186 = sphi 0, %s170
    $region4: #{tpu_custom_call.1} parent=1 // loop_header_branch
      %19 = sbr.rel (%p17) target = $region8
    $region5: #{tpu_custom_call.1} parent=1 // loop_body
      %s21 = ssub.s32 %s16, 1
      %s22 = ssub.s32 %s16, 2
      %s29 = sadd.s32 1, %s24
      %p30 = scmp.ge.s32.totalorder %s29, 1
      %s31 = scalar_select %p30, 0, %s29
      %s32 = sadd.s32 1, %s23
      %s33 = scalar_select %p30, %s32, %s23
      %p34 = scmp.ge.s32.totalorder %s33, 2
      %s35 = scalar_select %p34, 0, %s33
      %s36 = ssub.s32 %s23, %s35
      %s37 = ssub.s32 %s24, %s31
      %s38 = sor.u32 %s36, %s37
      %p39 = scmp.eq.s32.totalorder %s38, 0
      %s41 = sadd.s32 %s40, 1
      %s42 = scalar_select %p39, %s40, %s41
      %p45 = pneg %p39
      %p46 = scmp.eq.s32.totalorder %s16, 1
      %p47 = por %p45, %p46
      %p48 = scmp.ne.s32.totalorder %s40, %s43
      %p49 = scmp.eq.s32.totalorder %s16, 0
      %p50 = por %p48, %p49
      %p51 = scmp.ne.s32.totalorder %s40, %s43
      %p52 = scmp.eq.s32.totalorder %s21, 1
      %p53 = por %p51, %p52
      %p54 = scmp.ne.s32.totalorder %s43, %s44
      %p55 = scmp.eq.s32.totalorder %s21, 0
      %p56 = por %p54, %p55
      %p57 = scmp.ne.s32.totalorder %s43, %s44
      %p58 = scmp.eq.s32.totalorder %s22, 1
      %p59 = por %p57, %p58
      %p61 = scmp.ne.s32.totalorder %s44, %s60
      %p62 = scmp.eq.s32.totalorder %s22, 0
      %p63 = por %p61, %p62
      %s65 = sadd.s32 %s64, 1
      %p68 = scmp.eq.s32.totalorder %s16, 1
      %p69 = scmp.ne.s32.totalorder %s64, %s66
      %p70 = scmp.eq.s32.totalorder %s16, 0
      %p71 = por %p69, %p70
      %p72 = scmp.ne.s32.totalorder %s64, %s66
      %p73 = scmp.eq.s32.totalorder %s21, 1
      %p74 = por %p72, %p73
      %p75 = scmp.ne.s32.totalorder %s66, %s67
      %p76 = scmp.eq.s32.totalorder %s21, 0
      %p77 = por %p75, %p76
      %p78 = scmp.ne.s32.totalorder %s66, %s67
      %p79 = scmp.eq.s32.totalorder %s22, 1
      %p80 = por %p78, %p79
      %p82 = scmp.ne.s32.totalorder %s67, %s81
      %p83 = scmp.eq.s32.totalorder %s22, 0
      %p84 = por %p82, %p83
      %s86 = sadd.s32 %s85, 1
      %p89 = scmp.eq.s32.totalorder %s16, 1
      %p90 = scmp.ne.s32.totalorder %s85, %s87
      %p91 = scmp.eq.s32.totalorder %s16, 0
      %p92 = por %p90, %p91
      %p93 = scmp.ne.s32.totalorder %s85, %s87
      %p94 = scmp.eq.s32.totalorder %s21, 1
      %p95 = por %p93, %p94
      %p96 = scmp.ne.s32.totalorder %s87, %s88
      %p97 = scmp.eq.s32.totalorder %s21, 0
      %p98 = por %p96, %p97
      %p99 = scmp.ne.s32.totalorder %s87, %s88
      %p100 = scmp.eq.s32.totalorder %s22, 1
      %p101 = por %p99, %p100
      %p103 = scmp.ne.s32.totalorder %s88, %s102
      %p104 = scmp.eq.s32.totalorder %s22, 0
      %p105 = por %p103, %p104
      %s106 = ssub.s32 %s23, %s35
      %s107 = ssub.s32 %s24, %s31
      %s108 = sor.u32 %s106, %s107
      %p109 = scmp.eq.s32.totalorder %s108, 0
      %s111 = sadd.s32 %s110, 1
      %s112 = scalar_select %p109, %s110, %s111
      %p115 = pneg %p109
      %p116 = scmp.eq.s32.totalorder %s16, 1
      %p117 = por %p115, %p116
      %p118 = scmp.ne.s32.totalorder %s110, %s113
      %p119 = scmp.eq.s32.totalorder %s16, 0
      %p120 = por %p118, %p119
      %p121 = scmp.ne.s32.totalorder %s110, %s113
      %p122 = scmp.eq.s32.totalorder %s21, 1
      %p123 = por %p121, %p122
      %p124 = scmp.ne.s32.totalorder %s113, %s114
      %p125 = scmp.eq.s32.totalorder %s21, 0
      %p126 = por %p124, %p125
      %p127 = scmp.ne.s32.totalorder %s113, %s114
      %p128 = scmp.eq.s32.totalorder %s22, 1
      %p129 = por %p127, %p128
      %p131 = scmp.ne.s32.totalorder %s114, %s130
      %p132 = scmp.eq.s32.totalorder %s22, 0
      %p133 = por %p131, %p132
      %s134 = ssub.s32 %s23, %s35
      %s135 = ssub.s32 %s24, %s31
      %s136 = sor.u32 %s134, %s135
      %p137 = scmp.eq.s32.totalorder %s136, 0
      %s139 = sadd.s32 %s138, 1
      %s140 = scalar_select %p137, %s138, %s139
      %p143 = pneg %p137
      %p144 = scmp.eq.s32.totalorder %s16, 1
      %p145 = por %p143, %p144
      %p146 = scmp.ne.s32.totalorder %s138, %s141
      %p147 = scmp.eq.s32.totalorder %s16, 0
      %p148 = por %p146, %p147
      %p149 = scmp.ne.s32.totalorder %s138, %s141
      %p150 = scmp.eq.s32.totalorder %s21, 1
      %p151 = por %p149, %p150
      %p152 = scmp.ne.s32.totalorder %s141, %s142
      %p153 = scmp.eq.s32.totalorder %s21, 0
      %p154 = por %p152, %p153
      %p155 = scmp.ne.s32.totalorder %s141, %s142
      %p156 = scmp.eq.s32.totalorder %s22, 1
      %p157 = por %p155, %p156
      %p159 = scmp.ne.s32.totalorder %s142, %s158
      %p160 = scmp.eq.s32.totalorder %s22, 0
      %p161 = por %p159, %p160
      %s162 = ssub.s32 %s23, %s35
      %s163 = ssub.s32 %s24, %s31
      %s164 = sor.u32 %s162, %s163
      %p165 = scmp.eq.s32.totalorder %s164, 0
      %s167 = sadd.s32 %s166, 1
      %s168 = scalar_select %p165, %s166, %s167
      %p171 = pneg %p165
      %p172 = scmp.eq.s32.totalorder %s16, 1
      %p173 = por %p171, %p172
      %p174 = scmp.ne.s32.totalorder %s166, %s169
      %p175 = scmp.eq.s32.totalorder %s16, 0
      %p176 = por %p174, %p175
      %p177 = scmp.ne.s32.totalorder %s166, %s169
      %p178 = scmp.eq.s32.totalorder %s21, 1
      %p179 = por %p177, %p178
      %p180 = scmp.ne.s32.totalorder %s169, %s170
      %p181 = scmp.eq.s32.totalorder %s21, 0
      %p182 = por %p180, %p181
      %p183 = scmp.ne.s32.totalorder %s169, %s170
      %p184 = scmp.eq.s32.totalorder %s22, 1
      %p185 = por %p183, %p184
      %p187 = scmp.ne.s32.totalorder %s170, %s186
      %p188 = scmp.eq.s32.totalorder %s22, 0
      %p189 = por %p187, %p188
      %p190 = scmp.le.s32.totalorder 1, %s16
      %p191 = scmp.lt.s32.totalorder %s16, 3
      %p192 = pnand %p190, %p191
      %p193 = pneg %p192
      // Predicated region
      $region9: #{tpu_custom_call.1} parent=5 // pred_check
        _
      $region10: #{tpu_custom_call.1} parent=5 // pred_check_branch
        %195 = sbr.rel (%p192) target = $region12
      $region11: #{tpu_custom_call.1} parent=5 // pred_region
        %s196 = ssub.s32 %s16, 1
        // Predicated region
        $region13: #{tpu_custom_call.1} parent=11 // pred_check
          %p197 = pneg %p77
        $region14: #{tpu_custom_call.1} parent=11 // pred_check_branch
          %199 = sbr.rel (%p197) target = $region16
        $region15: #{tpu_custom_call.1} parent=11 // pred_region
          %201 = vsyncadd [#allocation5], 0
          %s202 = sshll.u32 %s1, 4
          %s203 = int_to_ptr.hbm [resolvable:$true] %s202
          %s204 = sshll.u32 [#allocation4], 4
          %s205 = int_to_ptr.vmem [resolvable:$true] %s204
          %210 = dma.hbm_to_vmem [thread:$0]  %s203, 256, %s205, [#allocation5], 64, 64, 4
        $region16: #{tpu_custom_call.1} parent=11 // pred_fallthru
          _
        // Predicated region
        $region17: #{tpu_custom_call.1} parent=11 // pred_check
          %p211 = pneg %p98
        $region18: #{tpu_custom_call.1} parent=11 // pred_check_branch
          %213 = sbr.rel (%p211) target = $region20
        $region19: #{tpu_custom_call.1} parent=11 // pred_region
          _
        $region20: #{tpu_custom_call.1} parent=11 // pred_fallthru
          _
      $region12: #{tpu_custom_call.1} parent=5 // pred_fallthru
        _
      %p214 = scmp.lt.s32.totalorder %s16, 2
      // Predicated region
      $region21: #{tpu_custom_call.1} parent=5 // pred_check
        %p215 = pneg %p214
      $region22: #{tpu_custom_call.1} parent=5 // pred_check_branch
        %217 = sbr.rel (%p215) target = $region24
      $region23: #{tpu_custom_call.1} parent=5 // pred_region
        // Predicated region
        $region25: #{tpu_custom_call.1} parent=23 // pred_check
          %p218 = pneg %p50
        $region26: #{tpu_custom_call.1} parent=23 // pred_check_branch
          %220 = sbr.rel (%p218) target = $region28
        $region27: #{tpu_custom_call.1} parent=23 // pred_region
          %s221 = sand.u32 %s40, 1
          %s222 = scalar_lea.sflag [#allocation3], %s221
          %s223 = sand.u32 %s40, 1
          %s224 = smul.addr %s223, 8
          %s225 = scalar_lea.vmem [#allocation2], %s224
          %227 = vsyncadd %s222, 0
          %s228 = sadd.s32 %s24, %s23
          %s229 = smul.addr %s228, 8
          %s230 = scalar_lea.hbm %s0, %s229
          %s232 = sshll.u32 %s230, 4
          %s233 = int_to_ptr.hbm [resolvable:$true] %s232
          %s234 = sshll.u32 %s225, 4
          %s235 = int_to_ptr.vmem [resolvable:$true] %s234
          %237 = dma.hbm_to_vmem [thread:$0]  %s233, 128, %s235, %s222
        $region28: #{tpu_custom_call.1} parent=23 // pred_fallthru
          _
      $region24: #{tpu_custom_call.1} parent=5 // pred_fallthru
        _
      %p238 = scmp.le.s32.totalorder 1, %s16
      %p239 = scmp.lt.s32.totalorder %s16, 3
      %p240 = pnand %p238, %p239
      %p241 = pneg %p240
      // Predicated region
      $region29: #{tpu_custom_call.1} parent=5 // pred_check
        _
      $region30: #{tpu_custom_call.1} parent=5 // pred_check_branch
        %243 = sbr.rel (%p240) target = $region32
      $region31: #{tpu_custom_call.1} parent=5 // pred_region
        %s244 = ssub.s32 %s16, 1
        %s245 = sand.u32 %s43, 1
        %s246 = scalar_lea.sflag [#allocation3], %s245
        %s247 = sand.u32 %s43, 1
        %s248 = smul.addr %s247, 8
        %s249 = scalar_lea.vmem [#allocation2], %s248
        // Predicated region
        $region33: #{tpu_custom_call.1} parent=31 // pred_check
          %p250 = pneg %p56
        $region34: #{tpu_custom_call.1} parent=31 // pred_check_branch
          %252 = sbr.rel (%p250) target = $region36
        $region35: #{tpu_custom_call.1} parent=31 // pred_region
          %254 = dma.done %s246, 128
        $region36: #{tpu_custom_call.1} parent=31 // pred_fallthru
          _
        // Predicated region
        $region37: #{tpu_custom_call.1} parent=31 // pred_check
          %p255 = pneg %p77
        $region38: #{tpu_custom_call.1} parent=31 // pred_check_branch
          %257 = sbr.rel (%p255) target = $region40
        $region39: #{tpu_custom_call.1} parent=31 // pred_region
          %259 = dma.done [#allocation5], 256
        $region40: #{tpu_custom_call.1} parent=31 // pred_fallthru
          _
        %s260 = sand.u32 %s43, 1
        %s261 = scalar_lea.sflag [#allocation3], %s260
        %s262 = sand.u32 %s43, 1
        %s263 = smul.addr %s262, 8
        %s264 = scalar_lea.vmem [#allocation2], %s263
        %p265 = pneg %p56
        %p266 = pneg %p53
        %p267 = pneg %p77
        %p268 = pneg %p74
        %p269 = pneg %p98
        %p270 = pneg %p95
        %p271 = pneg %p126
        %p272 = pneg %p123
        %p273 = scmp.lt.s32.totalorder %s25, 1
        %s274 = scalar_select %p273, %s25, 1
        %p275 = scmp.lt.s32.totalorder %s26, 0
        %s276 = scalar_select %p275, %s26, 0
        %s277 = smul.addr %s274, 8
        %s278 = sadd.s32 %s276, %s277
        %s279 = smul.addr %s278, 4
        %s280 = scalar_lea.vmem %s3, %s279
        %p281 = pneg %p154
        %p282 = pneg %p151
        %p283 = scmp.lt.s32.totalorder %s25, 1
        %s284 = scalar_select %p283, %s25, 1
        %p285 = scmp.lt.s32.totalorder %s26, 0
        %s286 = scalar_select %p285, %s26, 0
        %s287 = smul.addr %s284, 8
        %s288 = sadd.s32 %s286, %s287
        %s289 = smul.addr %s288, 4
        %s290 = scalar_lea.vmem %s4, %s289
        %p291 = pneg %p182
        %p292 = pneg %p179
        %p293 = scmp.lt.s32.totalorder %s25, 1
        %s294 = scalar_select %p293, %s25, 1
        %p295 = scmp.lt.s32.totalorder %s26, 0
        %s296 = scalar_select %p295, %s26, 0
        %s297 = smul.addr %s294, 8
        %s298 = sadd.s32 %s296, %s297
        %s299 = smul.addr %s298, 4
        %s300 = scalar_lea.vmem %s5, %s299
        %p301 = scmp.lt.s32.totalorder %s25, 1
        %s302 = scalar_select %p301, %s25, 1
        %p303 = scmp.lt.s32.totalorder %s26, 0
        %s304 = scalar_select %p303, %s26, 0
        %s305 = smul.addr %s302, 8
        %s306 = sadd.s32 %s304, %s305
        %s307 = smul.addr %s306, 4
        %s308 = scalar_lea.vmem %s3, %s307
        %p309 = scmp.lt.s32.totalorder %s25, 1
        %s310 = scalar_select %p309, %s25, 1
        %p311 = scmp.lt.s32.totalorder %s26, 0
        %s312 = scalar_select %p311, %s26, 0
        %s313 = smul.addr %s310, 8
        %s314 = sadd.s32 %s312, %s313
        %s315 = smul.addr %s314, 4
        %s316 = scalar_lea.vmem %s4, %s315
        %p317 = scmp.lt.s32.totalorder %s25, 1
        %s318 = scalar_select %p317, %s25, 1
        %p319 = scmp.lt.s32.totalorder %s26, 0
        %s320 = scalar_select %p319, %s26, 0
        %s321 = smul.addr %s318, 8
        %s322 = sadd.s32 %s320, %s321
        %s323 = smul.addr %s322, 4
        %s324 = scalar_lea.vmem %s5, %s323
        %v326 = vld [vmem:[%s249] sm:$0xff]
        %v327 = vpack.c.bf16 %v326, %v326
        %v328 = vld [vmem:[#allocation4] sm:$0xf]
        %v329 = vld [vmem:[#allocation4 + $0x4] sm:$0xf]
        %v330 = vld [vmem:[#allocation4 + $0x8] sm:$0xf]
        %v331 = vld [vmem:[#allocation4 + $0xc] sm:$0xf]
        %v332 = vld [vmem:[%s2] sm:$0x1]
        %v334 = vperm.slane %v332, 0
        %v340 = vunpack.c.l.b16 %v328
        %v341 = vunpack.c.l.b16 %v329
        %v342 = vunpack.c.l.b16 %v330
        %v343 = vunpack.c.l.b16 %v331
        %v344 = vpack.c.b16 %v341, %v340
        %v345 = vpack.c.b16 %v343, %v342
        %vm348 = vcmask 261120
        %v350 = vsel %vm348, %v327, 0
        %352 = vmatpush.bf16.msra.mxu0 0
        %353 = vmatpush.bf16.msra.mxu0 0
        %354 = vmatpush.bf16.msra.mxu0 0
        %355 = vmatpush.bf16.msra.mxu0 0
        %356 = vmatpush.bf16.msra.mxu0 0
        %357 = vmatpush.bf16.msra.mxu0 0
        %358 = vmatpush.bf16.msra.mxu0 %v345
        %359 = vmatpush.bf16.msra.mxu0 %v344
        %360 = vmatmul.bf16.gmra.mxu0 %v350
        %v361 = vpop.f32.mrf.mxu0
        %v362 = vadd.f32 %v334, %v361
        %v363 = vpop.f32.mrf.mxu0
        %364 = vdwg.mxu0
        %366 = vrot.lane.b32.xlu0 %v362, 124
        %v367 = vpop.permute.xlu0 %366
        %369 = vrot.lane.b32.xlu0 %v362, 120
        %v370 = vpop.permute.xlu0 %369
        %372 = vrot.lane.b32.xlu0 %v362, 116
        %v373 = vpop.permute.xlu0 %372
        %375 = vrot.lane.b32.xlu0 %v362, 112
        %v376 = vpop.permute.xlu0 %375
        %378 = vrot.lane.b32.xlu0 %v362, 108
        %v379 = vpop.permute.xlu0 %378
        %381 = vrot.lane.b32.xlu0 %v362, 104
        %v382 = vpop.permute.xlu0 %381
        %384 = vrot.lane.b32.xlu0 %v362, 100
        %v385 = vpop.permute.xlu0 %384
        %v387 = vrot.slane %v370, 4
        %vm388 = vcmask 1047556
        %v389 = vsel %vm388, %v387, %v362
        %v390 = vrot.slane %v362, 4
        %v391 = vsel %vm388, %v370, %v390
        %v393 = vunpack.c.l.s4 1983009808
        %v394 = vunpack.c.0.s8 %v393
        %v395 = vperm.slane %v389, %v394
        %v397 = vunpack.c.l.s4 1983009808
        %v398 = vunpack.c.0.s8 %v397
        %v399 = vperm.slane %v391, %v398
        %v400 = vrot.slane %v373, 4
        %v401 = vsel %vm388, %v400, %v367
        %v402 = vrot.slane %v367, 4
        %v403 = vsel %vm388, %v373, %v402
        %v405 = vunpack.c.l.s4 1983009808
        %v406 = vunpack.c.0.s8 %v405
        %v407 = vperm.slane %v401, %v406
        %v409 = vunpack.c.l.s4 1983009808
        %v410 = vunpack.c.0.s8 %v409
        %v411 = vperm.slane %v403, %v410
        %v412 = vrot.slane %v382, 4
        %v413 = vsel %vm388, %v412, %v376
        %v414 = vrot.slane %v376, 4
        %v415 = vsel %vm388, %v382, %v414
        %v417 = vunpack.c.l.s4 1983009808
        %v418 = vunpack.c.0.s8 %v417
        %v419 = vperm.slane %v413, %v418
        %v421 = vunpack.c.l.s4 1983009808
        %v422 = vunpack.c.0.s8 %v421
        %v423 = vperm.slane %v415, %v422
        %v424 = vrot.slane %v385, 4
        %v425 = vsel %vm388, %v424, %v379
        %v426 = vrot.slane %v379, 4
        %v427 = vsel %vm388, %v385, %v426
        %v429 = vunpack.c.l.s4 1983009808
        %v430 = vunpack.c.0.s8 %v429
        %v431 = vperm.slane %v425, %v430
        %v433 = vunpack.c.l.s4 1983009808
        %v434 = vunpack.c.0.s8 %v433
        %v435 = vperm.slane %v427, %v434
        %v436 = vrot.slane %v407, 4
        %v437 = vsel %vm388, %v436, %v395
        %v438 = vrot.slane %v395, 4
        %v439 = vsel %vm388, %v407, %v438
        %v441 = vunpack.c.l.s4 1934713408
        %v442 = vunpack.c.0.s8 %v441
        %v443 = vperm.slane %v437, %v442
        %v445 = vunpack.c.l.s4 1934713408
        %v446 = vunpack.c.0.s8 %v445
        %v447 = vperm.slane %v439, %v446
        %v448 = vrot.slane %v411, 4
        %v449 = vsel %vm388, %v448, %v399
        %v450 = vrot.slane %v399, 4
        %v451 = vsel %vm388, %v411, %v450
        %v453 = vunpack.c.l.s4 1934713408
        %v454 = vunpack.c.0.s8 %v453
        %v455 = vperm.slane %v449, %v454
        %v457 = vunpack.c.l.s4 1934713408
        %v458 = vunpack.c.0.s8 %v457
        %v459 = vperm.slane %v451, %v458
        %v460 = vrot.slane %v431, 4
        %v461 = vsel %vm388, %v460, %v419
        %v462 = vrot.slane %v419, 4
        %v463 = vsel %vm388, %v431, %v462
        %v465 = vunpack.c.l.s4 1934713408
        %v466 = vunpack.c.0.s8 %v465
        %v467 = vperm.slane %v461, %v466
        %v469 = vunpack.c.l.s4 1934713408
        %v470 = vunpack.c.0.s8 %v469
        %v471 = vperm.slane %v463, %v470
        %v472 = vrot.slane %v435, 4
        %v473 = vsel %vm388, %v472, %v423
        %v474 = vrot.slane %v423, 4
        %v475 = vsel %vm388, %v435, %v474
        %v477 = vunpack.c.l.s4 1934713408
        %v478 = vunpack.c.0.s8 %v477
        %v479 = vperm.slane %v473, %v478
        %v481 = vunpack.c.l.s4 1934713408
        %v482 = vunpack.c.0.s8 %v481
        %v483 = vperm.slane %v475, %v482
        %v484 = vrot.slane %v467, 4
        %v485 = vsel %vm388, %v484, %v443
        %v486 = vrot.slane %v443, 4
        %v487 = vsel %vm388, %v467, %v486
        %v488 = vrot.slane %v471, 4
        %v489 = vsel %vm388, %v488, %v447
        %v490 = vrot.slane %v447, 4
        %v491 = vsel %vm388, %v471, %v490
        %v492 = vrot.slane %v479, 4
        %v493 = vsel %vm388, %v492, %v455
        %v494 = vrot.slane %v455, 4
        %v495 = vsel %vm388, %v479, %v494
        %v496 = vrot.slane %v483, 4
        %v497 = vsel %vm388, %v496, %v459
        %v498 = vrot.slane %v459, 4
        %v499 = vsel %vm388, %v483, %v498
        %v500 = vrot.slane %v489, 4
        %v501 = vsel %vm388, %v500, %v485
        %v502 = vrot.slane %v485, 4
        %v503 = vsel %vm388, %v489, %v502
        %v505 = vunpack.c.l.s4 1983009808
        %v506 = vunpack.c.0.s8 %v505
        %v507 = vperm.slane %v501, %v506
        %v509 = vunpack.c.l.s4 1983009808
        %v510 = vunpack.c.0.s8 %v509
        %v511 = vperm.slane %v503, %v510
        %v512 = vrot.slane %v491, 4
        %v513 = vsel %vm388, %v512, %v487
        %v514 = vrot.slane %v487, 4
        %v515 = vsel %vm388, %v491, %v514
        %v517 = vunpack.c.l.s4 1983009808
        %v518 = vunpack.c.0.s8 %v517
        %v519 = vperm.slane %v513, %v518
        %v521 = vunpack.c.l.s4 1983009808
        %v522 = vunpack.c.0.s8 %v521
        %v523 = vperm.slane %v515, %v522
        %v524 = vrot.slane %v497, 4
        %v525 = vsel %vm388, %v524, %v493
        %v526 = vrot.slane %v493, 4
        %v527 = vsel %vm388, %v497, %v526
        %v529 = vunpack.c.l.s4 1983009808
        %v530 = vunpack.c.0.s8 %v529
        %v531 = vperm.slane %v525, %v530
        %v533 = vunpack.c.l.s4 1983009808
        %v534 = vunpack.c.0.s8 %v533
        %v535 = vperm.slane %v527, %v534
        %v536 = vrot.slane %v499, 4
        %v537 = vsel %vm388, %v536, %v495
        %v538 = vrot.slane %v495, 4
        %v539 = vsel %vm388, %v499, %v538
        %v541 = vunpack.c.l.s4 1983009808
        %v542 = vunpack.c.0.s8 %v541
        %v543 = vperm.slane %v537, %v542
        %v545 = vunpack.c.l.s4 1983009808
        %v546 = vunpack.c.0.s8 %v545
        %v547 = vperm.slane %v539, %v546
        %v548 = vrot.slane %v519, 4
        %v549 = vsel %vm388, %v548, %v507
        %v550 = vrot.slane %v507, 4
        %v551 = vsel %vm388, %v519, %v550
        %v553 = vunpack.c.l.s4 1934713408
        %v554 = vunpack.c.0.s8 %v553
        %v555 = vperm.slane %v549, %v554
        %v557 = vunpack.c.l.s4 1934713408
        %v558 = vunpack.c.0.s8 %v557
        %v559 = vperm.slane %v551, %v558
        %v560 = vrot.slane %v523, 4
        %v561 = vsel %vm388, %v560, %v511
        %v562 = vrot.slane %v511, 4
        %v563 = vsel %vm388, %v523, %v562
        %v565 = vunpack.c.l.s4 1934713408
        %v566 = vunpack.c.0.s8 %v565
        %v567 = vperm.slane %v561, %v566
        %v569 = vunpack.c.l.s4 1934713408
        %v570 = vunpack.c.0.s8 %v569
        %v571 = vperm.slane %v563, %v570
        %v572 = vrot.slane %v543, 4
        %v573 = vsel %vm388, %v572, %v531
        %v574 = vrot.slane %v531, 4
        %v575 = vsel %vm388, %v543, %v574
        %v577 = vunpack.c.l.s4 1934713408
        %v578 = vunpack.c.0.s8 %v577
        %v579 = vperm.slane %v573, %v578
        %v581 = vunpack.c.l.s4 1934713408
        %v582 = vunpack.c.0.s8 %v581
        %v583 = vperm.slane %v575, %v582
        %v584 = vrot.slane %v547, 4
        %v585 = vsel %vm388, %v584, %v535
        %v586 = vrot.slane %v535, 4
        %v587 = vsel %vm388, %v547, %v586
        %v589 = vunpack.c.l.s4 1934713408
        %v590 = vunpack.c.0.s8 %v589
        %v591 = vperm.slane %v585, %v590
        %v593 = vunpack.c.l.s4 1934713408
        %v594 = vunpack.c.0.s8 %v593
        %v595 = vperm.slane %v587, %v594
        %v596 = vrot.slane %v579, 4
        %v597 = vsel %vm388, %v596, %v555
        %v598 = vrot.slane %v555, 4
        %v599 = vsel %vm388, %v579, %v598
        %v600 = vrot.slane %v583, 4
        %v601 = vsel %vm388, %v600, %v559
        %v602 = vrot.slane %v559, 4
        %v603 = vsel %vm388, %v583, %v602
        %v604 = vrot.slane %v591, 4
        %v605 = vsel %vm388, %v604, %v567
        %v606 = vrot.slane %v567, 4
        %v607 = vsel %vm388, %v591, %v606
        %v608 = vrot.slane %v595, 4
        %v609 = vsel %vm388, %v608, %v571
        %v610 = vrot.slane %v571, 4
        %v611 = vsel %vm388, %v595, %v610
        %v612 = vpack.c.bf16 %v597, %v597
        %v613 = vpack.c.bf16 %v599, %v599
        %v614 = vpack.c.bf16 %v601, %v601
        %v615 = vpack.c.bf16 %v603, %v603
        %v616 = vpack.c.bf16 %v605, %v605
        %v617 = vpack.c.bf16 %v607, %v607
        %v618 = vpack.c.bf16 %v609, %v609
        %v619 = vpack.c.bf16 %v611, %v611
        %vm620 = vcmask 27648
        %621 = vst.msk [vmem:[%s308] sm:$0xf] %vm620, %v612
        %622 = vst.msk [vmem:[%s308 + $0x4] sm:$0xf] %vm620, %v613
        %623 = vst.msk [vmem:[%s308 + $0x8] sm:$0xf] %vm620, %v614
        %624 = vst.msk [vmem:[%s308 + $0xc] sm:$0xf] %vm620, %v615
        %625 = vst.msk [vmem:[%s308 + $0x10] sm:$0xf] %vm620, %v616
        %626 = vst.msk [vmem:[%s308 + $0x14] sm:$0xf] %vm620, %v617
        %627 = vst.msk [vmem:[%s308 + $0x18] sm:$0xf] %vm620, %v618
        %628 = vst.msk [vmem:[%s308 + $0x1c] sm:$0xf] %vm620, %v619
        %629 = vrot.lane.b32.xlu0 %v362, 96
        %v630 = vpop.permute.xlu0 %629
        %631 = vrot.lane.b32.xlu0 %v367, 96
        %v632 = vpop.permute.xlu0 %631
        %633 = vrot.lane.b32.xlu0 %v370, 96
        %v634 = vpop.permute.xlu0 %633
        %635 = vrot.lane.b32.xlu0 %v373, 96
        %v636 = vpop.permute.xlu0 %635
        %637 = vrot.lane.b32.xlu0 %v376, 96
        %v638 = vpop.permute.xlu0 %637
        %639 = vrot.lane.b32.xlu0 %v379, 96
        %v640 = vpop.permute.xlu0 %639
        %641 = vrot.lane.b32.xlu0 %v382, 96
        %v642 = vpop.permute.xlu0 %641
        %643 = vrot.lane.b32.xlu0 %v385, 96
        %v644 = vpop.permute.xlu0 %643
        %v653 = vrot.slane %v634, 4
        %v654 = vsel %vm388, %v653, %v630
        %v655 = vrot.slane %v630, 4
        %v656 = vsel %vm388, %v634, %v655
        %v658 = vunpack.c.l.s4 1983009808
        %v659 = vunpack.c.0.s8 %v658
        %v660 = vperm.slane %v654, %v659
        %v662 = vunpack.c.l.s4 1983009808
        %v663 = vunpack.c.0.s8 %v662
        %v664 = vperm.slane %v656, %v663
        %v665 = vrot.slane %v636, 4
        %v666 = vsel %vm388, %v665, %v632
        %v667 = vrot.slane %v632, 4
        %v668 = vsel %vm388, %v636, %v667
        %v670 = vunpack.c.l.s4 1983009808
        %v671 = vunpack.c.0.s8 %v670
        %v672 = vperm.slane %v666, %v671
        %v674 = vunpack.c.l.s4 1983009808
        %v675 = vunpack.c.0.s8 %v674
        %v676 = vperm.slane %v668, %v675
        %v677 = vrot.slane %v642, 4
        %v678 = vsel %vm388, %v677, %v638
        %v679 = vrot.slane %v638, 4
        %v680 = vsel %vm388, %v642, %v679
        %v682 = vunpack.c.l.s4 1983009808
        %v683 = vunpack.c.0.s8 %v682
        %v684 = vperm.slane %v678, %v683
        %v686 = vunpack.c.l.s4 1983009808
        %v687 = vunpack.c.0.s8 %v686
        %v688 = vperm.slane %v680, %v687
        %v689 = vrot.slane %v644, 4
        %v690 = vsel %vm388, %v689, %v640
        %v691 = vrot.slane %v640, 4
        %v692 = vsel %vm388, %v644, %v691
        %v694 = vunpack.c.l.s4 1983009808
        %v695 = vunpack.c.0.s8 %v694
        %v696 = vperm.slane %v690, %v695
        %v698 = vunpack.c.l.s4 1983009808
        %v699 = vunpack.c.0.s8 %v698
        %v700 = vperm.slane %v692, %v699
        %v701 = vrot.slane %v672, 4
        %v702 = vsel %vm388, %v701, %v660
        %v703 = vrot.slane %v660, 4
        %v704 = vsel %vm388, %v672, %v703
        %v706 = vunpack.c.l.s4 1934713408
        %v707 = vunpack.c.0.s8 %v706
        %v708 = vperm.slane %v702, %v707
        %v710 = vunpack.c.l.s4 1934713408
        %v711 = vunpack.c.0.s8 %v710
        %v712 = vperm.slane %v704, %v711
        %v713 = vrot.slane %v676, 4
        %v714 = vsel %vm388, %v713, %v664
        %v715 = vrot.slane %v664, 4
        %v716 = vsel %vm388, %v676, %v715
        %v718 = vunpack.c.l.s4 1934713408
        %v719 = vunpack.c.0.s8 %v718
        %v720 = vperm.slane %v714, %v719
        %v722 = vunpack.c.l.s4 1934713408
        %v723 = vunpack.c.0.s8 %v722
        %v724 = vperm.slane %v716, %v723
        %v725 = vrot.slane %v696, 4
        %v726 = vsel %vm388, %v725, %v684
        %v727 = vrot.slane %v684, 4
        %v728 = vsel %vm388, %v696, %v727
        %v730 = vunpack.c.l.s4 1934713408
        %v731 = vunpack.c.0.s8 %v730
        %v732 = vperm.slane %v726, %v731
        %v734 = vunpack.c.l.s4 1934713408
        %v735 = vunpack.c.0.s8 %v734
        %v736 = vperm.slane %v728, %v735
        %v737 = vrot.slane %v700, 4
        %v738 = vsel %vm388, %v737, %v688
        %v739 = vrot.slane %v688, 4
        %v740 = vsel %vm388, %v700, %v739
        %v742 = vunpack.c.l.s4 1934713408
        %v743 = vunpack.c.0.s8 %v742
        %v744 = vperm.slane %v738, %v743
        %v746 = vunpack.c.l.s4 1934713408
        %v747 = vunpack.c.0.s8 %v746
        %v748 = vperm.slane %v740, %v747
        %v749 = vrot.slane %v732, 4
        %v750 = vsel %vm388, %v749, %v708
        %v751 = vrot.slane %v708, 4
        %v752 = vsel %vm388, %v732, %v751
        %v753 = vrot.slane %v736, 4
        %v754 = vsel %vm388, %v753, %v712
        %v755 = vrot.slane %v712, 4
        %v756 = vsel %vm388, %v736, %v755
        %v757 = vrot.slane %v744, 4
        %v758 = vsel %vm388, %v757, %v720
        %v759 = vrot.slane %v720, 4
        %v760 = vsel %vm388, %v744, %v759
        %v761 = vrot.slane %v748, 4
        %v762 = vsel %vm388, %v761, %v724
        %v763 = vrot.slane %v724, 4
        %v764 = vsel %vm388, %v748, %v763
        %v765 = vrot.slane %v754, 4
        %v766 = vsel %vm388, %v765, %v750
        %v767 = vrot.slane %v750, 4
        %v768 = vsel %vm388, %v754, %v767
        %v770 = vunpack.c.l.s4 1983009808
        %v771 = vunpack.c.0.s8 %v770
        %v772 = vperm.slane %v766, %v771
        %v774 = vunpack.c.l.s4 1983009808
        %v775 = vunpack.c.0.s8 %v774
        %v776 = vperm.slane %v768, %v775
        %v777 = vrot.slane %v756, 4
        %v778 = vsel %vm388, %v777, %v752
        %v779 = vrot.slane %v752, 4
        %v780 = vsel %vm388, %v756, %v779
        %v782 = vunpack.c.l.s4 1983009808
        %v783 = vunpack.c.0.s8 %v782
        %v784 = vperm.slane %v778, %v783
        %v786 = vunpack.c.l.s4 1983009808
        %v787 = vunpack.c.0.s8 %v786
        %v788 = vperm.slane %v780, %v787
        %v789 = vrot.slane %v762, 4
        %v790 = vsel %vm388, %v789, %v758
        %v791 = vrot.slane %v758, 4
        %v792 = vsel %vm388, %v762, %v791
        %v794 = vunpack.c.l.s4 1983009808
        %v795 = vunpack.c.0.s8 %v794
        %v796 = vperm.slane %v790, %v795
        %v798 = vunpack.c.l.s4 1983009808
        %v799 = vunpack.c.0.s8 %v798
        %v800 = vperm.slane %v792, %v799
        %v801 = vrot.slane %v764, 4
        %v802 = vsel %vm388, %v801, %v760
        %v803 = vrot.slane %v760, 4
        %v804 = vsel %vm388, %v764, %v803
        %v806 = vunpack.c.l.s4 1983009808
        %v807 = vunpack.c.0.s8 %v806
        %v808 = vperm.slane %v802, %v807
        %v810 = vunpack.c.l.s4 1983009808
        %v811 = vunpack.c.0.s8 %v810
        %v812 = vperm.slane %v804, %v811
        %v813 = vrot.slane %v784, 4
        %v814 = vsel %vm388, %v813, %v772
        %v815 = vrot.slane %v772, 4
        %v816 = vsel %vm388, %v784, %v815
        %v818 = vunpack.c.l.s4 1934713408
        %v819 = vunpack.c.0.s8 %v818
        %v820 = vperm.slane %v814, %v819
        %v822 = vunpack.c.l.s4 1934713408
        %v823 = vunpack.c.0.s8 %v822
        %v824 = vperm.slane %v816, %v823
        %v825 = vrot.slane %v788, 4
        %v826 = vsel %vm388, %v825, %v776
        %v827 = vrot.slane %v776, 4
        %v828 = vsel %vm388, %v788, %v827
        %v830 = vunpack.c.l.s4 1934713408
        %v831 = vunpack.c.0.s8 %v830
        %v832 = vperm.slane %v826, %v831
        %v834 = vunpack.c.l.s4 1934713408
        %v835 = vunpack.c.0.s8 %v834
        %v836 = vperm.slane %v828, %v835
        %v837 = vrot.slane %v808, 4
        %v838 = vsel %vm388, %v837, %v796
        %v839 = vrot.slane %v796, 4
        %v840 = vsel %vm388, %v808, %v839
        %v842 = vunpack.c.l.s4 1934713408
        %v843 = vunpack.c.0.s8 %v842
        %v844 = vperm.slane %v838, %v843
        %v846 = vunpack.c.l.s4 1934713408
        %v847 = vunpack.c.0.s8 %v846
        %v848 = vperm.slane %v840, %v847
        %v849 = vrot.slane %v812, 4
        %v850 = vsel %vm388, %v849, %v800
        %v851 = vrot.slane %v800, 4
        %v852 = vsel %vm388, %v812, %v851
        %v854 = vunpack.c.l.s4 1934713408
        %v855 = vunpack.c.0.s8 %v854
        %v856 = vperm.slane %v850, %v855
        %v858 = vunpack.c.l.s4 1934713408
        %v859 = vunpack.c.0.s8 %v858
        %v860 = vperm.slane %v852, %v859
        %v861 = vrot.slane %v844, 4
        %v862 = vsel %vm388, %v861, %v820
        %v863 = vrot.slane %v820, 4
        %v864 = vsel %vm388, %v844, %v863
        %v865 = vrot.slane %v848, 4
        %v866 = vsel %vm388, %v865, %v824
        %v867 = vrot.slane %v824, 4
        %v868 = vsel %vm388, %v848, %v867
        %v869 = vrot.slane %v856, 4
        %v870 = vsel %vm388, %v869, %v832
        %v871 = vrot.slane %v832, 4
        %v872 = vsel %vm388, %v856, %v871
        %v873 = vrot.slane %v860, 4
        %v874 = vsel %vm388, %v873, %v836
        %v875 = vrot.slane %v836, 4
        %v876 = vsel %vm388, %v860, %v875
        %v877 = vpack.c.bf16 %v862, %v862
        %v878 = vpack.c.bf16 %v864, %v864
        %v879 = vpack.c.bf16 %v866, %v866
        %v880 = vpack.c.bf16 %v868, %v868
        %v881 = vpack.c.bf16 %v870, %v870
        %v882 = vpack.c.bf16 %v872, %v872
        %v883 = vpack.c.bf16 %v874, %v874
        %v884 = vpack.c.bf16 %v876, %v876
        %885 = vst.msk [vmem:[%s316] sm:$0xf] %vm620, %v877
        %886 = vst.msk [vmem:[%s316 + $0x4] sm:$0xf] %vm620, %v878
        %887 = vst.msk [vmem:[%s316 + $0x8] sm:$0xf] %vm620, %v879
        %888 = vst.msk [vmem:[%s316 + $0xc] sm:$0xf] %vm620, %v880
        %889 = vst.msk [vmem:[%s316 + $0x10] sm:$0xf] %vm620, %v881
        %890 = vst.msk [vmem:[%s316 + $0x14] sm:$0xf] %vm620, %v882
        %891 = vst.msk [vmem:[%s316 + $0x18] sm:$0xf] %vm620, %v883
        %892 = vst.msk [vmem:[%s316 + $0x1c] sm:$0xf] %vm620, %v884
        %893 = vrot.lane.b32.xlu0 %v362, 64
        %v894 = vpop.permute.xlu0 %893
        %895 = vrot.lane.b32.xlu0 %v367, 64
        %v896 = vpop.permute.xlu0 %895
        %897 = vrot.lane.b32.xlu0 %v370, 64
        %v898 = vpop.permute.xlu0 %897
        %899 = vrot.lane.b32.xlu0 %v373, 64
        %v900 = vpop.permute.xlu0 %899
        %901 = vrot.lane.b32.xlu0 %v376, 64
        %v902 = vpop.permute.xlu0 %901
        %903 = vrot.lane.b32.xlu0 %v379, 64
        %v904 = vpop.permute.xlu0 %903
        %905 = vrot.lane.b32.xlu0 %v382, 64
        %v906 = vpop.permute.xlu0 %905
        %907 = vrot.lane.b32.xlu0 %v385, 64
        %v908 = vpop.permute.xlu0 %907
        %v917 = vrot.slane %v898, 4
        %v918 = vsel %vm388, %v917, %v894
        %v919 = vrot.slane %v894, 4
        %v920 = vsel %vm388, %v898, %v919
        %v922 = vunpack.c.l.s4 1983009808
        %v923 = vunpack.c.0.s8 %v922
        %v924 = vperm.slane %v918, %v923
        %v926 = vunpack.c.l.s4 1983009808
        %v927 = vunpack.c.0.s8 %v926
        %v928 = vperm.slane %v920, %v927
        %v929 = vrot.slane %v900, 4
        %v930 = vsel %vm388, %v929, %v896
        %v931 = vrot.slane %v896, 4
        %v932 = vsel %vm388, %v900, %v931
        %v934 = vunpack.c.l.s4 1983009808
        %v935 = vunpack.c.0.s8 %v934
        %v936 = vperm.slane %v930, %v935
        %v938 = vunpack.c.l.s4 1983009808
        %v939 = vunpack.c.0.s8 %v938
        %v940 = vperm.slane %v932, %v939
        %v941 = vrot.slane %v906, 4
        %v942 = vsel %vm388, %v941, %v902
        %v943 = vrot.slane %v902, 4
        %v944 = vsel %vm388, %v906, %v943
        %v946 = vunpack.c.l.s4 1983009808
        %v947 = vunpack.c.0.s8 %v946
        %v948 = vperm.slane %v942, %v947
        %v950 = vunpack.c.l.s4 1983009808
        %v951 = vunpack.c.0.s8 %v950
        %v952 = vperm.slane %v944, %v951
        %v953 = vrot.slane %v908, 4
        %v954 = vsel %vm388, %v953, %v904
        %v955 = vrot.slane %v904, 4
        %v956 = vsel %vm388, %v908, %v955
        %v958 = vunpack.c.l.s4 1983009808
        %v959 = vunpack.c.0.s8 %v958
        %v960 = vperm.slane %v954, %v959
        %v962 = vunpack.c.l.s4 1983009808
        %v963 = vunpack.c.0.s8 %v962
        %v964 = vperm.slane %v956, %v963
        %v965 = vrot.slane %v936, 4
        %v966 = vsel %vm388, %v965, %v924
        %v967 = vrot.slane %v924, 4
        %v968 = vsel %vm388, %v936, %v967
        %v970 = vunpack.c.l.s4 1934713408
        %v971 = vunpack.c.0.s8 %v970
        %v972 = vperm.slane %v966, %v971
        %v974 = vunpack.c.l.s4 1934713408
        %v975 = vunpack.c.0.s8 %v974
        %v976 = vperm.slane %v968, %v975
        %v977 = vrot.slane %v940, 4
        %v978 = vsel %vm388, %v977, %v928
        %v979 = vrot.slane %v928, 4
        %v980 = vsel %vm388, %v940, %v979
        %v982 = vunpack.c.l.s4 1934713408
        %v983 = vunpack.c.0.s8 %v982
        %v984 = vperm.slane %v978, %v983
        %v986 = vunpack.c.l.s4 1934713408
        %v987 = vunpack.c.0.s8 %v986
        %v988 = vperm.slane %v980, %v987
        %v989 = vrot.slane %v960, 4
        %v990 = vsel %vm388, %v989, %v948
        %v991 = vrot.slane %v948, 4
        %v992 = vsel %vm388, %v960, %v991
        %v994 = vunpack.c.l.s4 1934713408
        %v995 = vunpack.c.0.s8 %v994
        %v996 = vperm.slane %v990, %v995
        %v998 = vunpack.c.l.s4 1934713408
        %v999 = vunpack.c.0.s8 %v998
        %v1000 = vperm.slane %v992, %v999
        %v1001 = vrot.slane %v964, 4
        %v1002 = vsel %vm388, %v1001, %v952
        %v1003 = vrot.slane %v952, 4
        %v1004 = vsel %vm388, %v964, %v1003
        %v1006 = vunpack.c.l.s4 1934713408
        %v1007 = vunpack.c.0.s8 %v1006
        %v1008 = vperm.slane %v1002, %v1007
        %v1010 = vunpack.c.l.s4 1934713408
        %v1011 = vunpack.c.0.s8 %v1010
        %v1012 = vperm.slane %v1004, %v1011
        %v1013 = vrot.slane %v996, 4
        %v1014 = vsel %vm388, %v1013, %v972
        %v1015 = vrot.slane %v972, 4
        %v1016 = vsel %vm388, %v996, %v1015
        %v1017 = vrot.slane %v1000, 4
        %v1018 = vsel %vm388, %v1017, %v976
        %v1019 = vrot.slane %v976, 4
        %v1020 = vsel %vm388, %v1000, %v1019
        %v1021 = vrot.slane %v1008, 4
        %v1022 = vsel %vm388, %v1021, %v984
        %v1023 = vrot.slane %v984, 4
        %v1024 = vsel %vm388, %v1008, %v1023
        %v1025 = vrot.slane %v1012, 4
        %v1026 = vsel %vm388, %v1025, %v988
        %v1027 = vrot.slane %v988, 4
        %v1028 = vsel %vm388, %v1012, %v1027
        %v1029 = vrot.slane %v1018, 4
        %v1030 = vsel %vm388, %v1029, %v1014
        %v1031 = vrot.slane %v1014, 4
        %v1032 = vsel %vm388, %v1018, %v1031
        %v1034 = vunpack.c.l.s4 1983009808
        %v1035 = vunpack.c.0.s8 %v1034
        %v1036 = vperm.slane %v1030, %v1035
        %v1038 = vunpack.c.l.s4 1983009808
        %v1039 = vunpack.c.0.s8 %v1038
        %v1040 = vperm.slane %v1032, %v1039
        %v1041 = vrot.slane %v1020, 4
        %v1042 = vsel %vm388, %v1041, %v1016
        %v1043 = vrot.slane %v1016, 4
        %v1044 = vsel %vm388, %v1020, %v1043
        %v1046 = vunpack.c.l.s4 1983009808
        %v1047 = vunpack.c.0.s8 %v1046
        %v1048 = vperm.slane %v1042, %v1047
        %v1050 = vunpack.c.l.s4 1983009808
        %v1051 = vunpack.c.0.s8 %v1050
        %v1052 = vperm.slane %v1044, %v1051
        %v1053 = vrot.slane %v1026, 4
        %v1054 = vsel %vm388, %v1053, %v1022
        %v1055 = vrot.slane %v1022, 4
        %v1056 = vsel %vm388, %v1026, %v1055
        %v1058 = vunpack.c.l.s4 1983009808
        %v1059 = vunpack.c.0.s8 %v1058
        %v1060 = vperm.slane %v1054, %v1059
        %v1062 = vunpack.c.l.s4 1983009808
        %v1063 = vunpack.c.0.s8 %v1062
        %v1064 = vperm.slane %v1056, %v1063
        %v1065 = vrot.slane %v1028, 4
        %v1066 = vsel %vm388, %v1065, %v1024
        %v1067 = vrot.slane %v1024, 4
        %v1068 = vsel %vm388, %v1028, %v1067
        %v1070 = vunpack.c.l.s4 1983009808
        %v1071 = vunpack.c.0.s8 %v1070
        %v1072 = vperm.slane %v1066, %v1071
        %v1074 = vunpack.c.l.s4 1983009808
        %v1075 = vunpack.c.0.s8 %v1074
        %v1076 = vperm.slane %v1068, %v1075
        %v1077 = vrot.slane %v1048, 4
        %v1078 = vsel %vm388, %v1077, %v1036
        %v1079 = vrot.slane %v1036, 4
        %v1080 = vsel %vm388, %v1048, %v1079
        %v1082 = vunpack.c.l.s4 1934713408
        %v1083 = vunpack.c.0.s8 %v1082
        %v1084 = vperm.slane %v1078, %v1083
        %v1086 = vunpack.c.l.s4 1934713408
        %v1087 = vunpack.c.0.s8 %v1086
        %v1088 = vperm.slane %v1080, %v1087
        %v1089 = vrot.slane %v1052, 4
        %v1090 = vsel %vm388, %v1089, %v1040
        %v1091 = vrot.slane %v1040, 4
        %v1092 = vsel %vm388, %v1052, %v1091
        %v1094 = vunpack.c.l.s4 1934713408
        %v1095 = vunpack.c.0.s8 %v1094
        %v1096 = vperm.slane %v1090, %v1095
        %v1098 = vunpack.c.l.s4 1934713408
        %v1099 = vunpack.c.0.s8 %v1098
        %v1100 = vperm.slane %v1092, %v1099
        %v1101 = vrot.slane %v1072, 4
        %v1102 = vsel %vm388, %v1101, %v1060
        %v1103 = vrot.slane %v1060, 4
        %v1104 = vsel %vm388, %v1072, %v1103
        %v1106 = vunpack.c.l.s4 1934713408
        %v1107 = vunpack.c.0.s8 %v1106
        %v1108 = vperm.slane %v1102, %v1107
        %v1110 = vunpack.c.l.s4 1934713408
        %v1111 = vunpack.c.0.s8 %v1110
        %v1112 = vperm.slane %v1104, %v1111
        %v1113 = vrot.slane %v1076, 4
        %v1114 = vsel %vm388, %v1113, %v1064
        %v1115 = vrot.slane %v1064, 4
        %v1116 = vsel %vm388, %v1076, %v1115
        %v1118 = vunpack.c.l.s4 1934713408
        %v1119 = vunpack.c.0.s8 %v1118
        %v1120 = vperm.slane %v1114, %v1119
        %v1122 = vunpack.c.l.s4 1934713408
        %v1123 = vunpack.c.0.s8 %v1122
        %v1124 = vperm.slane %v1116, %v1123
        %v1125 = vrot.slane %v1108, 4
        %v1126 = vsel %vm388, %v1125, %v1084
        %v1127 = vrot.slane %v1084, 4
        %v1128 = vsel %vm388, %v1108, %v1127
        %v1129 = vrot.slane %v1112, 4
        %v1130 = vsel %vm388, %v1129, %v1088
        %v1131 = vrot.slane %v1088, 4
        %v1132 = vsel %vm388, %v1112, %v1131
        %v1133 = vrot.slane %v1120, 4
        %v1134 = vsel %vm388, %v1133, %v1096
        %v1135 = vrot.slane %v1096, 4
        %v1136 = vsel %vm388, %v1120, %v1135
        %v1137 = vrot.slane %v1124, 4
        %v1138 = vsel %vm388, %v1137, %v1100
        %v1139 = vrot.slane %v1100, 4
        %v1140 = vsel %vm388, %v1124, %v1139
        %v1141 = vpack.c.bf16 %v1126, %v1126
        %v1142 = vpack.c.bf16 %v1128, %v1128
        %v1143 = vpack.c.bf16 %v1130, %v1130
        %v1144 = vpack.c.bf16 %v1132, %v1132
        %v1145 = vpack.c.bf16 %v1134, %v1134
        %v1146 = vpack.c.bf16 %v1136, %v1136
        %v1147 = vpack.c.bf16 %v1138, %v1138
        %v1148 = vpack.c.bf16 %v1140, %v1140
        %1149 = vst.msk [vmem:[%s324] sm:$0xf] %vm620, %v1141
        %1150 = vst.msk [vmem:[%s324 + $0x4] sm:$0xf] %vm620, %v1142
        %1151 = vst.msk [vmem:[%s324 + $0x8] sm:$0xf] %vm620, %v1143
        %1152 = vst.msk [vmem:[%s324 + $0xc] sm:$0xf] %vm620, %v1144
        %1153 = vst.msk [vmem:[%s324 + $0x10] sm:$0xf] %vm620, %v1145
        %1154 = vst.msk [vmem:[%s324 + $0x14] sm:$0xf] %vm620, %v1146
        %1155 = vst.msk [vmem:[%s324 + $0x18] sm:$0xf] %vm620, %v1147
        %1156 = vst.msk [vmem:[%s324 + $0x1c] sm:$0xf] %vm620, %v1148
        %p1157 = scmp.lt.s32.totalorder %s25, 1
        %s1158 = scalar_select %p1157, %s25, 1
        %p1159 = scmp.lt.s32.totalorder %s26, 0
        %s1160 = scalar_select %p1159, %s26, 0
        %s1161 = smul.addr %s1158, 8
        %s1162 = sadd.s32 %s1160, %s1161
        %s1163 = smul.addr %s1162, 4
        %s1164 = scalar_lea.vmem %s3, %s1163
        %p1165 = scmp.lt.s32.totalorder %s25, 1
        %s1166 = scalar_select %p1165, %s25, 1
        %p1167 = scmp.lt.s32.totalorder %s26, 0
        %s1168 = scalar_select %p1167, %s26, 0
        %s1169 = smul.addr %s1166, 8
        %s1170 = sadd.s32 %s1168, %s1169
        %s1171 = smul.addr %s1170, 4
        %s1172 = scalar_lea.vmem %s4, %s1171
        %p1173 = scmp.lt.s32.totalorder %s25, 1
        %s1174 = scalar_select %p1173, %s25, 1
        %p1175 = scmp.lt.s32.totalorder %s26, 0
        %s1176 = scalar_select %p1175, %s26, 0
        %s1177 = smul.addr %s1174, 8
        %s1178 = sadd.s32 %s1176, %s1177
        %s1179 = smul.addr %s1178, 4
        %s1180 = scalar_lea.vmem %s5, %s1179
        // Predicated region
        $region41: #{tpu_custom_call.1} parent=31 // pred_check
          %p1181 = pneg %p123
        $region42: #{tpu_custom_call.1} parent=31 // pred_check_branch
          %1183 = sbr.rel (%p1181) target = $region44
        $region43: #{tpu_custom_call.1} parent=31 // pred_region
          _
        $region44: #{tpu_custom_call.1} parent=31 // pred_fallthru
          _
        // Predicated region
        $region45: #{tpu_custom_call.1} parent=31 // pred_check
          %p1184 = pneg %p151
        $region46: #{tpu_custom_call.1} parent=31 // pred_check_branch
          %1186 = sbr.rel (%p1184) target = $region48
        $region47: #{tpu_custom_call.1} parent=31 // pred_region
          _
        $region48: #{tpu_custom_call.1} parent=31 // pred_fallthru
          _
        // Predicated region
        $region49: #{tpu_custom_call.1} parent=31 // pred_check
          %p1187 = pneg %p179
        $region50: #{tpu_custom_call.1} parent=31 // pred_check_branch
          %1189 = sbr.rel (%p1187) target = $region52
        $region51: #{tpu_custom_call.1} parent=31 // pred_region
          _
        $region52: #{tpu_custom_call.1} parent=31 // pred_fallthru
          _
      $region32: #{tpu_custom_call.1} parent=5 // pred_fallthru
        _
      %p1190 = scmp.le.s32.totalorder 2, %s16
      // Predicated region
      $region53: #{tpu_custom_call.1} parent=5 // pred_check
        %p1191 = pneg %p1190
      $region54: #{tpu_custom_call.1} parent=5 // pred_check_branch
        %1193 = sbr.rel (%p1191) target = $region56
      $region55: #{tpu_custom_call.1} parent=5 // pred_region
        %s1194 = ssub.s32 %s16, 2
        // Predicated region
        $region57: #{tpu_custom_call.1} parent=55 // pred_check
          %p1195 = pneg %p129
        $region58: #{tpu_custom_call.1} parent=55 // pred_check_branch
          %1197 = sbr.rel (%p1195) target = $region60
        $region59: #{tpu_custom_call.1} parent=55 // pred_region
          %p1198 = scmp.lt.s32.totalorder %s27, 1
          %s1199 = scalar_select %p1198, %s27, 1
          %p1200 = scmp.lt.s32.totalorder %s28, 0
          %s1201 = scalar_select %p1200, %s28, 0
          %s1202 = smul.addr %s1199, 8
          %s1203 = sadd.s32 %s1201, %s1202
          %s1204 = smul.addr %s1203, 4
          %s1205 = scalar_lea.vmem %s3, %s1204
        $region60: #{tpu_custom_call.1} parent=55 // pred_fallthru
          _
        // Predicated region
        $region61: #{tpu_custom_call.1} parent=55 // pred_check
          %p1206 = pneg %p157
        $region62: #{tpu_custom_call.1} parent=55 // pred_check_branch
          %1208 = sbr.rel (%p1206) target = $region64
        $region63: #{tpu_custom_call.1} parent=55 // pred_region
          %p1209 = scmp.lt.s32.totalorder %s27, 1
          %s1210 = scalar_select %p1209, %s27, 1
          %p1211 = scmp.lt.s32.totalorder %s28, 0
          %s1212 = scalar_select %p1211, %s28, 0
          %s1213 = smul.addr %s1210, 8
          %s1214 = sadd.s32 %s1212, %s1213
          %s1215 = smul.addr %s1214, 4
          %s1216 = scalar_lea.vmem %s4, %s1215
        $region64: #{tpu_custom_call.1} parent=55 // pred_fallthru
          _
        // Predicated region
        $region65: #{tpu_custom_call.1} parent=55 // pred_check
          %p1217 = pneg %p185
        $region66: #{tpu_custom_call.1} parent=55 // pred_check_branch
          %1219 = sbr.rel (%p1217) target = $region68
        $region67: #{tpu_custom_call.1} parent=55 // pred_region
          %p1220 = scmp.lt.s32.totalorder %s27, 1
          %s1221 = scalar_select %p1220, %s27, 1
          %p1222 = scmp.lt.s32.totalorder %s28, 0
          %s1223 = scalar_select %p1222, %s28, 0
          %s1224 = smul.addr %s1221, 8
          %s1225 = sadd.s32 %s1223, %s1224
          %s1226 = smul.addr %s1225, 4
          %s1227 = scalar_lea.vmem %s5, %s1226
        $region68: #{tpu_custom_call.1} parent=55 // pred_fallthru
          _
      $region56: #{tpu_custom_call.1} parent=5 // pred_fallthru
        _
    $region6: #{tpu_custom_call.1} parent=1 // loop_footer
      %s20 = sadd.s32 1, %s16
    $region7: #{tpu_custom_call.1} parent=1 // loop_footer_branch
      %15 = sbr.rel target = $region3
    $region8: #{tpu_custom_call.1} parent=1 // loop_exit
      _
    %1228 = vsyncpa [#allocation3], 1
    %s1229 = scalar_lea.sflag [#allocation3], 1
    %1230 = vsyncpa %s1229, 1
    %1231 = vsyncpa [#allocation5], 1

</llo_original>
